<compile_context>
chip_gen: v7x
topology: tpu7x:2x2x1
jax: 0.10.0
libtpu: 0.0.40
codegen_flags: <defaults>
</compile_context>

<pallas_src>
import math
from functools import partial

import jax
import jax.numpy as jnp
from jax.experimental import pallas as pl
from jax.experimental.pallas import tpu as pltpu

BN_EPS = 1e-5
LANE = 128
SUBLANE = 16          # row quantum (bf16-friendly; also valid for f32 blocks)
TILE_M_MAX = 1024     # 1024-row x tile: f32 x (4 MiB x 2 bufs) + bf16 weights/out
                      # ~= 10 MiB total -> fits v5e's 16 MiB scoped-VMEM default,
                      # ample headroom on v6e/v7x (32 MiB scoped, 64 MiB phys/TC on v7x).
MIN_SPLIT_ROWS = 256  # only force a 2-step grid (v7x dual-TC split) when each core gets >=256 rows


def _round_up(x, m):
    return ((x + m - 1) // m) * m


def _mlp_kernel(x_ref, w1_ref, w2_ref, w3_ref, b12_ref, b3_ref, o_ref):
    # In-kernel f32->bf16 cast of x: VPU work hidden under the MXU; avoids a separate
    # wrapper-side cast pass that would re-read + re-write x through HBM.
    x = x_ref[...].astype(w1_ref.dtype)
    # block 1: Linear -> ReLU  (eval BN folded into w2/b2'; Dropout = identity in eval)
    h = jnp.dot(x, w1_ref[...], preferred_element_type=jnp.float32)
    h = jnp.maximum(h + b12_ref[0:1, :], 0.0).astype(w2_ref.dtype)
    # block 2: Linear -> ReLU  (eval BN folded into w3/b3')
    h = jnp.dot(h, w2_ref[...], preferred_element_type=jnp.float32)
    h = jnp.maximum(h + b12_ref[1:2, :], 0.0).astype(w3_ref.dtype)
    # output Linear (columns zero-padded to one 128-lane tile -> dense, unmasked stores)
    out = jnp.dot(h, w3_ref[...], preferred_element_type=jnp.float32) + b3_ref[...]
    o_ref[...] = out.astype(o_ref.dtype)


def fold_params(params, compute_dtype=jnp.bfloat16):
    """Fold eval-mode BatchNorm exactly into the adjacent Linears, cast weights to bf16
    and zero-pad the output Linear to a 128-lane multiple.

    Call ONCE per model and reuse the result (hoisted out of the per-forward path:
    redoing this every call re-reads/re-writes ~1.5 MB of weights before the kernel)."""
    s1 = params["g1"] * jax.lax.rsqrt(params["v1"] + BN_EPS)   # (1, h)
    s2 = params["g2"] * jax.lax.rsqrt(params["v2"] + BN_EPS)   # (1, h)
    shift1 = params["bt1"] - params["m1"] * s1                 # (1, h)
    shift2 = params["bt2"] - params["m2"] * s2                 # (1, h)

    w1 = params["w1"]                                          # (D_in, h)
    b1 = params["b1"]                                          # (1, h)
    w2 = params["w2"] * s1.T                                   # scale rows of w2 by s1
    b2 = params["b2"] + shift1 @ params["w2"]                  # (1, h)
    w3 = params["w3"] * s2.T                                   # (h, out)
    b3 = params["b3"] + shift2 @ params["w3"]                  # (1, out)

    out_dim = int(w3.shape[1])
    out_pad = _round_up(out_dim, LANE)                         # keep at 128: don't pad further
    w3p = jnp.zeros((w3.shape[0], out_pad), jnp.float32).at[:, :out_dim].set(w3)
    b3p = jnp.zeros((1, out_pad), jnp.float32).at[:, :out_dim].set(b3)
    b12 = jnp.concatenate([b1, b2], axis=0).astype(jnp.float32)  # (2, h)

    return {
        "w1": w1.astype(compute_dtype),
        "w2": w2.astype(compute_dtype),
        "w3p": w3p.astype(compute_dtype),
        "b12": b12,
        "b3p": b3p,
        "out_dim": out_dim,
    }


def _choose_tiling(n):
    """Pick (tile_m, grid_steps, padded_rows) with minimal batch padding."""
    n_rows = _round_up(max(n, 1), SUBLANE)
    # Enough steps to cover the batch with <= TILE_M_MAX-row tiles; batch is padded only
    # to the sublane quantum, never up to a tile_m multiple.
    steps = pl.cdiv(n_rows, TILE_M_MAX)
    # Keep the "parallel" batch axis splittable across v7x's two TensorCores whenever
    # each core still gets a reasonably sized tile (v5e/v6e: the 2nd step is just a loop iter).
    if steps < 2 and n_rows >= 2 * MIN_SPLIT_ROWS:
        steps = 2
    tile_m = _round_up(pl.cdiv(n_rows, steps), SUBLANE)
    return tile_m, steps, tile_m * steps


@partial(jax.jit, static_argnames=("out_dim",))
def _forward_padded(x2d, w1, w2, w3p, b12, b3p, *, out_dim):
    n, d_in = x2d.shape
    h = w1.shape[1]
    out_pad = w3p.shape[1]
    tile_m, steps, n_pad = _choose_tiling(n)
    if n_pad != n:
        x2d = jnp.pad(x2d, ((0, n_pad - n), (0, 0)))  # sublane-quantum pad only

    out = pl.pallas_call(
        _mlp_kernel,
        out_shape=jax.ShapeDtypeStruct((n_pad, out_pad), jnp.bfloat16),
        grid_spec=pltpu.PrefetchScalarGridSpec(
            num_scalar_prefetch=0,
            grid=(steps,),
            in_specs=[
                pl.BlockSpec((tile_m, d_in), lambda i: (i, 0)),   # x: pipelined over batch
                pl.BlockSpec((d_in, h), lambda i: (0, 0)),        # weights: VMEM-resident
                pl.BlockSpec((h, h), lambda i: (0, 0)),
                pl.BlockSpec((h, out_pad), lambda i: (0, 0)),
                pl.BlockSpec((2, h), lambda i: (0, 0)),           # packed biases (b1, b2')
                pl.BlockSpec((1, out_pad), lambda i: (0, 0)),     # padded b3'
            ],
            out_specs=pl.BlockSpec((tile_m, out_pad), lambda i: (i, 0)),
        ),
        compiler_params=pltpu.CompilerParams(
            dimension_semantics=("parallel",)),
    )(x2d, w1, w2, w3p, b12, b3p)

    # bf16 kernel output halves HBM write traffic; return f32 like the PyTorch module.
    return out[:n, :out_dim].astype(jnp.float32)


def simple_model_forward(x, folded):
    """x: (N, ...) arbitrary trailing dims; flattened to (N, D_in) like x.view(N, -1)."""
    n = x.shape[0]
    x2d = x.reshape(n, -1)   # fed in native dtype; bf16 cast happens inside the kernel
    return _forward_padded(x2d, folded["w1"], folded["w2"], folded["w3p"],
                           folded["b12"], folded["b3p"], out_dim=folded["out_dim"])


def init_params(key, input_dim, output_dim, hidden_dim=256):
    """Deterministic init matching SimpleModel.init_weights (xavier_uniform, bias=0.01)."""
    def xavier(k, fan_in, fan_out):
        bound = math.sqrt(6.0 / (fan_in + fan_out))
        # stored as (in, out); xavier bound is symmetric in (fan_in, fan_out)
        return jax.random.uniform(k, (fan_in, fan_out), jnp.float32, -bound, bound)

    k1, k2, k3 = jax.random.split(key, 3)
    hd = hidden_dim
    return {
        "w1": xavier(k1, input_dim, hd),
        "b1": jnp.full((1, hd), 0.01, jnp.float32),
        "g1": jnp.ones((1, hd), jnp.float32),
        "bt1": jnp.zeros((1, hd), jnp.float32),
        "m1": jnp.zeros((1, hd), jnp.float32),
        "v1": jnp.ones((1, hd), jnp.float32),
        "w2": xavier(k2, hd, hd),
        "b2": jnp.full((1, hd), 0.01, jnp.float32),
        "g2": jnp.ones((1, hd), jnp.float32),
        "bt2": jnp.zeros((1, hd), jnp.float32),
        "m2": jnp.zeros((1, hd), jnp.float32),
        "v2": jnp.ones((1, hd), jnp.float32),
        "w3": xavier(k3, hd, output_dim),
        "b3": jnp.full((1, output_dim), 0.01, jnp.float32),
    }


def _reference_forward(x, params):
    """Pure-JAX f32 reference (unfolded BN) for correctness check."""
    n = x.shape[0]
    z = x.reshape(n, -1).astype(jnp.float32)
    z = jnp.maximum(z @ params["w1"] + params["b1"], 0.0)
    z = (z - params["m1"]) / jnp.sqrt(params["v1"] + BN_EPS) * params["g1"] + params["bt1"]
    z = jnp.maximum(z @ params["w2"] + params["b2"], 0.0)
    z = (z - params["m2"]) / jnp.sqrt(params["v2"] + BN_EPS) * params["g2"] + params["bt2"]
    return z @ params["w3"] + params["b3"]


if __name__ == "__main__":
    key = jax.random.PRNGKey(0)
    k_x, k_p = jax.random.split(key)

    # small, module-consistent shapes: batch=8, "image" (4,16,16) -> input_dim=1024
    batch, chan, spatial = 8, 4, 16
    input_dim = chan * spatial * spatial
    hidden_dim = 256
    output_dim = 16

    x = jax.random.normal(k_x, (batch, chan, spatial, spatial), jnp.float32)
    params = init_params(k_p, input_dim, output_dim, hidden_dim)

    folded = fold_params(params)          # hoisted: BN fold / bf16 cast / lane pad done ONCE
    out = simple_model_forward(x, folded)
    out = jax.block_until_ready(out)

    ref = _reference_forward(x, params)
    assert out.shape == (batch, output_dim)
    # bf16 inputs/weights/output with f32 MXU accumulation: compare against the f32
    # reference with a bf16-appropriate relative tolerance.
    scale = jnp.max(jnp.abs(ref)) + 1e-6
    err = jnp.max(jnp.abs(out - ref))
    assert err / scale < 5e-2, f"mismatch vs pure-JAX reference: rel err {float(err / scale):.4f}"

    print("KERNEL_OK")
</pallas_src>

<mosaic_0001>
module attributes {stable_mosaic.version = 11 : i64} {
  func.func @_mlp_kernel(%arg0: i32, %arg1: memref<16x1024xf32, #tpu.memory_space<vmem>>, %arg2: memref<1024x256xbf16, #tpu.memory_space<vmem>>, %arg3: memref<256x256xbf16, #tpu.memory_space<vmem>>, %arg4: memref<256x128xbf16, #tpu.memory_space<vmem>>, %arg5: memref<2x256xf32, #tpu.memory_space<vmem>>, %arg6: memref<1x128xf32, #tpu.memory_space<vmem>>, %arg7: memref<16x128xbf16, #tpu.memory_space<vmem>>) attributes {dimension_semantics = [#tpu.dimension_semantics<parallel>], iteration_bounds = array<i64: 1>, scalar_prefetch = 0 : i64, scratch_operands = 0 : i64, tpu.core_type = #tpu.core_type<tc>, window_params = [{transform_indices = @transform_0, window_bounds = array<i64: 16, 1024>}, {pipeline_mode = #tpu.pipeline_mode<synchronous>, transform_indices = @transform_1, window_bounds = array<i64: 1024, 256>}, {pipeline_mode = #tpu.pipeline_mode<synchronous>, transform_indices = @transform_2, window_bounds = array<i64: 256, 256>}, {pipeline_mode = #tpu.pipeline_mode<synchronous>, transform_indices = @transform_3, window_bounds = array<i64: 256, 128>}, {pipeline_mode = #tpu.pipeline_mode<synchronous>, transform_indices = @transform_4, window_bounds = array<i64: 2, 256>}, {pipeline_mode = #tpu.pipeline_mode<synchronous>, transform_indices = @transform_5, window_bounds = array<i64: 1, 128>}, {transform_indices = @transform_6, window_bounds = array<i64: 16, 128>}]} {
    %c0 = arith.constant 0 : index
    %c0_0 = arith.constant 0 : index
    %0 = vector.load %arg1[%c0, %c0_0] : memref<16x1024xf32, #tpu.memory_space<vmem>>, vector<16x1024xf32>
    %1 = arith.truncf %0 : vector<16x1024xf32> to vector<16x1024xbf16>
    %c0_1 = arith.constant 0 : index
    %c0_2 = arith.constant 0 : index
    %2 = vector.load %arg2[%c0_1, %c0_2] : memref<1024x256xbf16, #tpu.memory_space<vmem>>, vector<1024x256xbf16>
    %cst = arith.constant dense<0.000000e+00> : vector<16x256xf32>
    %3 = tpu.matmul %1, %2, %cst {dimension_numbers = #tpu.dot_dimension_numbers<[1], [0], [0], [1], [0, 0, 1, 1], [], []>} : vector<16x1024xbf16>, vector<1024x256xbf16>, vector<16x256xf32> -> vector<16x256xf32>
    %c0_3 = arith.constant 0 : index
    %c0_4 = arith.constant 0 : index
    %4 = vector.load %arg5[%c0_3, %c0_4] : memref<2x256xf32, #tpu.memory_space<vmem>>, vector<1x256xf32>
    %5 = vector.broadcast %4 : vector<1x256xf32> to vector<16x256xf32>
    %6 = arith.addf %3, %5 : vector<16x256xf32>
    %cst_5 = arith.constant 0.000000e+00 : f32
    %7 = vector.broadcast %cst_5 : f32 to vector<16x256xf32>
    %8 = arith.maximumf %6, %7 : vector<16x256xf32>
    %9 = arith.truncf %8 : vector<16x256xf32> to vector<16x256xbf16>
    %c0_6 = arith.constant 0 : index
    %c0_7 = arith.constant 0 : index
    %10 = vector.load %arg3[%c0_6, %c0_7] : memref<256x256xbf16, #tpu.memory_space<vmem>>, vector<256x256xbf16>
    %cst_8 = arith.constant dense<0.000000e+00> : vector<16x256xf32>
    %11 = tpu.matmul %9, %10, %cst_8 {dimension_numbers = #tpu.dot_dimension_numbers<[1], [0], [0], [1], [0, 0, 1, 1], [], []>} : vector<16x256xbf16>, vector<256x256xbf16>, vector<16x256xf32> -> vector<16x256xf32>
    %c1 = arith.constant 1 : index
    %c0_9 = arith.constant 0 : index
    %12 = vector.load %arg5[%c1, %c0_9] : memref<2x256xf32, #tpu.memory_space<vmem>>, vector<1x256xf32>
    %13 = vector.broadcast %12 : vector<1x256xf32> to vector<16x256xf32>
    %14 = arith.addf %11, %13 : vector<16x256xf32>
    %cst_10 = arith.constant 0.000000e+00 : f32
    %15 = vector.broadcast %cst_10 : f32 to vector<16x256xf32>
    %16 = arith.maximumf %14, %15 : vector<16x256xf32>
    %17 = arith.truncf %16 : vector<16x256xf32> to vector<16x256xbf16>
    %c0_11 = arith.constant 0 : index
    %c0_12 = arith.constant 0 : index
    %18 = vector.load %arg4[%c0_11, %c0_12] : memref<256x128xbf16, #tpu.memory_space<vmem>>, vector<256x128xbf16>
    %cst_13 = arith.constant dense<0.000000e+00> : vector<16x128xf32>
    %19 = tpu.matmul %17, %18, %cst_13 {dimension_numbers = #tpu.dot_dimension_numbers<[1], [0], [0], [1], [0, 0, 1, 1], [], []>} : vector<16x256xbf16>, vector<256x128xbf16>, vector<16x128xf32> -> vector<16x128xf32>
    %c0_14 = arith.constant 0 : index
    %c0_15 = arith.constant 0 : index
    %20 = vector.load %arg6[%c0_14, %c0_15] : memref<1x128xf32, #tpu.memory_space<vmem>>, vector<1x128xf32>
    %21 = vector.broadcast %20 : vector<1x128xf32> to vector<16x128xf32>
    %22 = arith.addf %19, %21 : vector<16x128xf32>
    %23 = arith.truncf %22 : vector<16x128xf32> to vector<16x128xbf16>
    %c0_16 = arith.constant 0 : index
    %c0_17 = arith.constant 0 : index
    %24 = vector.load %arg7[%c0_16, %c0_17] : memref<16x128xbf16, #tpu.memory_space<vmem>>, vector<16x128xbf16>
    tpu.vector_store %arg7[%c0_16, %c0_17], %23 {strides = array<i32>} : memref<16x128xbf16, #tpu.memory_space<vmem>>, vector<16x128xbf16>,
    return
  }
  func.func @transform_0(%arg0: i32) -> (i32, i32) {
    %c0_i32 = arith.constant 0 : i32
    %c0_i32_0 = arith.constant 0 : i32
    return %arg0, %c0_i32 : i32, i32
  }
  func.func @transform_1(%arg0: i32) -> (i32, i32) {
    %c0_i32 = arith.constant 0 : i32
    %c0_i32_0 = arith.constant 0 : i32
    %c0_i32_1 = arith.constant 0 : i32
    return %c0_i32, %c0_i32_0 : i32, i32
  }
  func.func @transform_2(%arg0: i32) -> (i32, i32) {
    %c0_i32 = arith.constant 0 : i32
    %c0_i32_0 = arith.constant 0 : i32
    %c0_i32_1 = arith.constant 0 : i32
    return %c0_i32, %c0_i32_0 : i32, i32
  }
  func.func @transform_3(%arg0: i32) -> (i32, i32) {
    %c0_i32 = arith.constant 0 : i32
    %c0_i32_0 = arith.constant 0 : i32
    %c0_i32_1 = arith.constant 0 : i32
    return %c0_i32, %c0_i32_0 : i32, i32
  }
  func.func @transform_4(%arg0: i32) -> (i32, i32) {
    %c0_i32 = arith.constant 0 : i32
    %c0_i32_0 = arith.constant 0 : i32
    %c0_i32_1 = arith.constant 0 : i32
    return %c0_i32, %c0_i32_0 : i32, i32
  }
  func.func @transform_5(%arg0: i32) -> (i32, i32) {
    %c0_i32 = arith.constant 0 : i32
    %c0_i32_0 = arith.constant 0 : i32
    %c0_i32_1 = arith.constant 0 : i32
    return %c0_i32, %c0_i32_0 : i32, i32
  }
  func.func @transform_6(%arg0: i32) -> (i32, i32) {
    %c0_i32 = arith.constant 0 : i32
    %c0_i32_0 = arith.constant 0 : i32
    return %arg0, %c0_i32 : i32, i32
  }
}

</mosaic_0001>

<llo_original>
// kernel: _forward_padded.1
$region0: #{_forward_padded.1}
  #allocation0 [shape = 'u32[]', space=smem, size = 0x4, offset = 0x4, fixed_abs, tag = 'smem constant byte address 0x4 - core index']
  #allocation1 [shape = 'u32[144,128]{1,0:T(1,128)}', space=vmem, size = 0x12000, scoped, tag = 'internal scratch']
  %s0 = inlined_call_operand.vmem [shape: f32[16,1024], index: 0, kind: input, shape index: {}]
  %s1 = inlined_call_operand.hbm [shape: bf16[1024,256], index: 1, kind: input, shape index: {}]
  %s2 = inlined_call_operand.hbm [shape: bf16[256,256], index: 2, kind: input, shape index: {}]
  %s3 = inlined_call_operand.vmem [shape: bf16[256,128], index: 3, kind: input, shape index: {}]
  %s4 = inlined_call_operand.vmem [shape: f32[2,256], index: 4, kind: input, shape index: {}]
  %s5 = inlined_call_operand.vmem [shape: f32[1,128], index: 5, kind: input, shape index: {}]
  %s6 = inlined_call_operand.vmem [shape: bf16[16,128], index: 6, kind: output, shape index: {}]
  %s7 = sld [smem:[#allocation0]]
  $region42: #{_forward_padded.1} parent=0
    _
  %s9 = ssub.s32 1, %s7
  %s10 = scalar_select 0, %s9, %s7
  $region1: #{_forward_padded.1} parent=0
    #allocation2 [shape = 'u8[524288]{0}', space=vmem, size = 0x80000, scoped, tag = 'input window, operand 1, single buffered']
    #allocation3 [shape = 's32[1]{0}', space=sflag, size = 0x4, scoped, tag = 'scoped memory for _forward_padded.1']
    #allocation4 [shape = 'u8[131072]{0}', space=vmem, size = 0x20000, scoped, tag = 'input window, operand 2, single buffered']
    #allocation5 [shape = 's32[1]{0}', space=sflag, size = 0x4, scoped, tag = 'scoped memory for _forward_padded.1']
    %11 = vsyncpa [#allocation3], 0
    %12 = vsyncpa [#allocation5], 0
    // Predicated region
    $region2: #{_forward_padded.1} parent=1 // pred_check
      _
    $region3: #{_forward_padded.1} parent=1 // pred_check_branch
      %14 = sbr.rel (0) target = $region5
    $region4: #{_forward_padded.1} parent=1 // pred_region
      _
    $region5: #{_forward_padded.1} parent=1 // pred_fallthru
      _
    // Predicated region
    $region6: #{_forward_padded.1} parent=1 // pred_check
      _
    $region7: #{_forward_padded.1} parent=1 // pred_check_branch
      %16 = sbr.rel (0) target = $region9
    $region8: #{_forward_padded.1} parent=1 // pred_region
      %s18 = ssub.s32 16384, 16384
      %19 = vsyncadd [#allocation3], %s18
      %s20 = sshll.u32 [#allocation2], 4
      %s21 = int_to_ptr.vmem [resolvable:$true] %s20
      %26 = dma.hbm_to_vmem [thread:$0]  %s1, 16384, %s21, [#allocation3], 128, 128, 8
    $region9: #{_forward_padded.1} parent=1 // pred_fallthru
      _
    // Predicated region
    $region10: #{_forward_padded.1} parent=1 // pred_check
      _
    $region11: #{_forward_padded.1} parent=1 // pred_check_branch
      %28 = sbr.rel (0) target = $region13
    $region12: #{_forward_padded.1} parent=1 // pred_region
      %s30 = ssub.s32 4096, 4096
      %31 = vsyncadd [#allocation5], %s30
      %s32 = sshll.u32 [#allocation4], 4
      %s33 = int_to_ptr.vmem [resolvable:$true] %s32
      %38 = dma.hbm_to_vmem [thread:$0]  %s2, 4096, %s33, [#allocation5], 128, 128, 8
    $region13: #{_forward_padded.1} parent=1 // pred_fallthru
      _
    // Predicated region
    $region14: #{_forward_padded.1} parent=1 // pred_check
      _
    $region15: #{_forward_padded.1} parent=1 // pred_check_branch
      %40 = sbr.rel (0) target = $region17
    $region16: #{_forward_padded.1} parent=1 // pred_region
      _
    $region17: #{_forward_padded.1} parent=1 // pred_fallthru
      _
    // Predicated region
    $region18: #{_forward_padded.1} parent=1 // pred_check
      _
    $region19: #{_forward_padded.1} parent=1 // pred_check_branch
      %42 = sbr.rel (0) target = $region21
    $region20: #{_forward_padded.1} parent=1 // pred_region
      _
    $region21: #{_forward_padded.1} parent=1 // pred_fallthru
      _
    // Predicated region
    $region22: #{_forward_padded.1} parent=1 // pred_check
      _
    $region23: #{_forward_padded.1} parent=1 // pred_check_branch
      %44 = sbr.rel (0) target = $region25
    $region24: #{_forward_padded.1} parent=1 // pred_region
      _
    $region25: #{_forward_padded.1} parent=1 // pred_fallthru
      _
    // Predicated region
    $region26: #{_forward_padded.1} parent=1 // pred_check
      _
    $region27: #{_forward_padded.1} parent=1 // pred_check_branch
      %46 = sbr.rel (0) target = $region29
    $region28: #{_forward_padded.1} parent=1 // pred_region
      %47 = dma.done [#allocation3], 16384
    $region29: #{_forward_padded.1} parent=1 // pred_fallthru
      _
    // Predicated region
    $region30: #{_forward_padded.1} parent=1 // pred_check
      _
    $region31: #{_forward_padded.1} parent=1 // pred_check_branch
      %49 = sbr.rel (0) target = $region33
    $region32: #{_forward_padded.1} parent=1 // pred_region
      %50 = dma.done [#allocation5], 4096
    $region33: #{_forward_padded.1} parent=1 // pred_fallthru
      _
    %v52 = vld [vmem:[%s0] sm:$0xff]
    %v53 = vld [vmem:[%s0 + $0x8] sm:$0xff]
    %v54 = vld [vmem:[%s0 + $0x10] sm:$0xff]
    %v55 = vld [vmem:[%s0 + $0x18] sm:$0xff]
    %v56 = vld [vmem:[%s0 + $0x20] sm:$0xff]
    %v57 = vld [vmem:[%s0 + $0x28] sm:$0xff]
    %v58 = vld [vmem:[%s0 + $0x30] sm:$0xff]
    %v59 = vld [vmem:[%s0 + $0x38] sm:$0xff]
    %v60 = vld [vmem:[%s0 + $0x40] sm:$0xff]
    %v61 = vld [vmem:[%s0 + $0x48] sm:$0xff]
    %v62 = vld [vmem:[%s0 + $0x50] sm:$0xff]
    %v63 = vld [vmem:[%s0 + $0x58] sm:$0xff]
    %v64 = vld [vmem:[%s0 + $0x60] sm:$0xff]
    %v65 = vld [vmem:[%s0 + $0x68] sm:$0xff]
    %v66 = vld [vmem:[%s0 + $0x70] sm:$0xff]
    %v67 = vld [vmem:[%s0 + $0x78] sm:$0xff]
    %v68 = vpack.c.bf16 %v60, %v52
    %v69 = vpack.c.bf16 %v61, %v53
    %v70 = vpack.c.bf16 %v62, %v54
    %v71 = vpack.c.bf16 %v63, %v55
    %v72 = vpack.c.bf16 %v64, %v56
    %v73 = vpack.c.bf16 %v65, %v57
    %v74 = vpack.c.bf16 %v66, %v58
    %v75 = vpack.c.bf16 %v67, %v59
    %v76 = vld [vmem:[#allocation2] sm:$0xff]
    %v77 = vld [vmem:[#allocation2 + $0x8] sm:$0xff]
    %v78 = vld [vmem:[#allocation2 + $0x10] sm:$0xff]
    %v79 = vld [vmem:[#allocation2 + $0x18] sm:$0xff]
    %v80 = vld [vmem:[#allocation2 + $0x20] sm:$0xff]
    %v81 = vld [vmem:[#allocation2 + $0x28] sm:$0xff]
    %v82 = vld [vmem:[#allocation2 + $0x30] sm:$0xff]
    %v83 = vld [vmem:[#allocation2 + $0x38] sm:$0xff]
    %v84 = vld [vmem:[#allocation2 + $0x40] sm:$0xff]
    %v85 = vld [vmem:[#allocation2 + $0x48] sm:$0xff]
    %v86 = vld [vmem:[#allocation2 + $0x50] sm:$0xff]
    %v87 = vld [vmem:[#allocation2 + $0x58] sm:$0xff]
    %v88 = vld [vmem:[#allocation2 + $0x60] sm:$0xff]
    %v89 = vld [vmem:[#allocation2 + $0x68] sm:$0xff]
    %v90 = vld [vmem:[#allocation2 + $0x70] sm:$0xff]
    %v91 = vld [vmem:[#allocation2 + $0x78] sm:$0xff]
    %v92 = vld [vmem:[#allocation2 + $0x80] sm:$0xff]
    %v93 = vld [vmem:[#allocation2 + $0x88] sm:$0xff]
    %v94 = vld [vmem:[#allocation2 + $0x90] sm:$0xff]
    %v95 = vld [vmem:[#allocation2 + $0x98] sm:$0xff]
    %v96 = vld [vmem:[#allocation2 + $0xa0] sm:$0xff]
    %v97 = vld [vmem:[#allocation2 + $0xa8] sm:$0xff]
    %v98 = vld [vmem:[#allocation2 + $0xb0] sm:$0xff]
    %v99 = vld [vmem:[#allocation2 + $0xb8] sm:$0xff]
    %v100 = vld [vmem:[#allocation2 + $0xc0] sm:$0xff]
    %v101 = vld [vmem:[#allocation2 + $0xc8] sm:$0xff]
    %v102 = vld [vmem:[#allocation2 + $0xd0] sm:$0xff]
    %v103 = vld [vmem:[#allocation2 + $0xd8] sm:$0xff]
    %v104 = vld [vmem:[#allocation2 + $0xe0] sm:$0xff]
    %v105 = vld [vmem:[#allocation2 + $0xe8] sm:$0xff]
    %v106 = vld [vmem:[#allocation2 + $0xf0] sm:$0xff]
    %v107 = vld [vmem:[#allocation2 + $0xf8] sm:$0xff]
    %v108 = vld [vmem:[#allocation2 + $0x100] sm:$0xff]
    %v109 = vld [vmem:[#allocation2 + $0x108] sm:$0xff]
    %v110 = vld [vmem:[#allocation2 + $0x110] sm:$0xff]
    %v111 = vld [vmem:[#allocation2 + $0x118] sm:$0xff]
    %v112 = vld [vmem:[#allocation2 + $0x120] sm:$0xff]
    %v113 = vld [vmem:[#allocation2 + $0x128] sm:$0xff]
    %v114 = vld [vmem:[#allocation2 + $0x130] sm:$0xff]
    %v115 = vld [vmem:[#allocation2 + $0x138] sm:$0xff]
    %v116 = vld [vmem:[#allocation2 + $0x140] sm:$0xff]
    %v117 = vld [vmem:[#allocation2 + $0x148] sm:$0xff]
    %v118 = vld [vmem:[#allocation2 + $0x150] sm:$0xff]
    %v119 = vld [vmem:[#allocation2 + $0x158] sm:$0xff]
    %v120 = vld [vmem:[#allocation2 + $0x160] sm:$0xff]
    %v121 = vld [vmem:[#allocation2 + $0x168] sm:$0xff]
    %v122 = vld [vmem:[#allocation2 + $0x170] sm:$0xff]
    %v123 = vld [vmem:[#allocation2 + $0x178] sm:$0xff]
    %v124 = vld [vmem:[#allocation2 + $0x180] sm:$0xff]
    %v125 = vld [vmem:[#allocation2 + $0x188] sm:$0xff]
    %v126 = vld [vmem:[#allocation2 + $0x190] sm:$0xff]
    %v127 = vld [vmem:[#allocation2 + $0x198] sm:$0xff]
    %v128 = vld [vmem:[#allocation2 + $0x1a0] sm:$0xff]
    %v129 = vld [vmem:[#allocation2 + $0x1a8] sm:$0xff]
    %v130 = vld [vmem:[#allocation2 + $0x1b0] sm:$0xff]
    %v131 = vld [vmem:[#allocation2 + $0x1b8] sm:$0xff]
    %v132 = vld [vmem:[#allocation2 + $0x1c0] sm:$0xff]
    %v133 = vld [vmem:[#allocation2 + $0x1c8] sm:$0xff]
    %v134 = vld [vmem:[#allocation2 + $0x1d0] sm:$0xff]
    %v135 = vld [vmem:[#allocation2 + $0x1d8] sm:$0xff]
    %v136 = vld [vmem:[#allocation2 + $0x1e0] sm:$0xff]
    %v137 = vld [vmem:[#allocation2 + $0x1e8] sm:$0xff]
    %v138 = vld [vmem:[#allocation2 + $0x1f0] sm:$0xff]
    %v139 = vld [vmem:[#allocation2 + $0x1f8] sm:$0xff]
    %v140 = vld [vmem:[#allocation2 + $0x200] sm:$0xff]
    %v141 = vld [vmem:[#allocation2 + $0x208] sm:$0xff]
    %v142 = vld [vmem:[#allocation2 + $0x210] sm:$0xff]
    %v143 = vld [vmem:[#allocation2 + $0x218] sm:$0xff]
    %v144 = vld [vmem:[#allocation2 + $0x220] sm:$0xff]
    %v145 = vld [vmem:[#allocation2 + $0x228] sm:$0xff]
    %v146 = vld [vmem:[#allocation2 + $0x230] sm:$0xff]
    %v147 = vld [vmem:[#allocation2 + $0x238] sm:$0xff]
    %v148 = vld [vmem:[#allocation2 + $0x240] sm:$0xff]
    %v149 = vld [vmem:[#allocation2 + $0x248] sm:$0xff]
    %v150 = vld [vmem:[#allocation2 + $0x250] sm:$0xff]
    %v151 = vld [vmem:[#allocation2 + $0x258] sm:$0xff]
    %v152 = vld [vmem:[#allocation2 + $0x260] sm:$0xff]
    %v153 = vld [vmem:[#allocation2 + $0x268] sm:$0xff]
    %v154 = vld [vmem:[#allocation2 + $0x270] sm:$0xff]
    %v155 = vld [vmem:[#allocation2 + $0x278] sm:$0xff]
    %v156 = vld [vmem:[#allocation2 + $0x280] sm:$0xff]
    %v157 = vld [vmem:[#allocation2 + $0x288] sm:$0xff]
    %v158 = vld [vmem:[#allocation2 + $0x290] sm:$0xff]
    %v159 = vld [vmem:[#allocation2 + $0x298] sm:$0xff]
    %v160 = vld [vmem:[#allocation2 + $0x2a0] sm:$0xff]
    %v161 = vld [vmem:[#allocation2 + $0x2a8] sm:$0xff]
    %v162 = vld [vmem:[#allocation2 + $0x2b0] sm:$0xff]
    %v163 = vld [vmem:[#allocation2 + $0x2b8] sm:$0xff]
    %v164 = vld [vmem:[#allocation2 + $0x2c0] sm:$0xff]
    %v165 = vld [vmem:[#allocation2 + $0x2c8] sm:$0xff]
    %v166 = vld [vmem:[#allocation2 + $0x2d0] sm:$0xff]
    %v167 = vld [vmem:[#allocation2 + $0x2d8] sm:$0xff]
    %v168 = vld [vmem:[#allocation2 + $0x2e0] sm:$0xff]
    %v169 = vld [vmem:[#allocation2 + $0x2e8] sm:$0xff]
    %v170 = vld [vmem:[#allocation2 + $0x2f0] sm:$0xff]
    %v171 = vld [vmem:[#allocation2 + $0x2f8] sm:$0xff]
    %v172 = vld [vmem:[#allocation2 + $0x300] sm:$0xff]
    %v173 = vld [vmem:[#allocation2 + $0x308] sm:$0xff]
    %v174 = vld [vmem:[#allocation2 + $0x310] sm:$0xff]
    %v175 = vld [vmem:[#allocation2 + $0x318] sm:$0xff]
    %v176 = vld [vmem:[#allocation2 + $0x320] sm:$0xff]
    %v177 = vld [vmem:[#allocation2 + $0x328] sm:$0xff]
    %v178 = vld [vmem:[#allocation2 + $0x330] sm:$0xff]
    %v179 = vld [vmem:[#allocation2 + $0x338] sm:$0xff]
    %v180 = vld [vmem:[#allocation2 + $0x340] sm:$0xff]
    %v181 = vld [vmem:[#allocation2 + $0x348] sm:$0xff]
    %v182 = vld [vmem:[#allocation2 + $0x350] sm:$0xff]
    %v183 = vld [vmem:[#allocation2 + $0x358] sm:$0xff]
    %v184 = vld [vmem:[#allocation2 + $0x360] sm:$0xff]
    %v185 = vld [vmem:[#allocation2 + $0x368] sm:$0xff]
    %v186 = vld [vmem:[#allocation2 + $0x370] sm:$0xff]
    %v187 = vld [vmem:[#allocation2 + $0x378] sm:$0xff]
    %v188 = vld [vmem:[#allocation2 + $0x380] sm:$0xff]
    %v189 = vld [vmem:[#allocation2 + $0x388] sm:$0xff]
    %v190 = vld [vmem:[#allocation2 + $0x390] sm:$0xff]
    %v191 = vld [vmem:[#allocation2 + $0x398] sm:$0xff]
    %v192 = vld [vmem:[#allocation2 + $0x3a0] sm:$0xff]
    %v193 = vld [vmem:[#allocation2 + $0x3a8] sm:$0xff]
    %v194 = vld [vmem:[#allocation2 + $0x3b0] sm:$0xff]
    %v195 = vld [vmem:[#allocation2 + $0x3b8] sm:$0xff]
    %v196 = vld [vmem:[#allocation2 + $0x3c0] sm:$0xff]
    %v197 = vld [vmem:[#allocation2 + $0x3c8] sm:$0xff]
    %v198 = vld [vmem:[#allocation2 + $0x3d0] sm:$0xff]
    %v199 = vld [vmem:[#allocation2 + $0x3d8] sm:$0xff]
    %v200 = vld [vmem:[#allocation2 + $0x3e0] sm:$0xff]
    %v201 = vld [vmem:[#allocation2 + $0x3e8] sm:$0xff]
    %v202 = vld [vmem:[#allocation2 + $0x3f0] sm:$0xff]
    %v203 = vld [vmem:[#allocation2 + $0x3f8] sm:$0xff]
    %v204 = vld [vmem:[%s4] ss:$2 sm:$0x3]
    %v206 = vlaneseq
    %v207 = vshrl.u32 %v206, 7
    %v208 = vsub.s32 0, %v207
    %v209 = vrot.slane %v204, %v208
    %v210 = vlaneseq
    %v211 = vshrl.u32 %v210, 7
    %v212 = vsub.s32 1, %v211
    %v213 = vrot.slane %v204, %v212
    %v344 = vunpack.c.l.b16 %v76
    %v345 = vunpack.c.h.b16 %v76
    %v346 = vunpack.c.l.b16 %v77
    %v347 = vunpack.c.h.b16 %v77
    %v348 = vunpack.c.l.b16 %v78
    %v349 = vunpack.c.h.b16 %v78
    %v350 = vunpack.c.l.b16 %v79
    %v351 = vunpack.c.h.b16 %v79
    %v352 = vunpack.c.l.b16 %v80
    %v353 = vunpack.c.h.b16 %v80
    %v354 = vunpack.c.l.b16 %v81
    %v355 = vunpack.c.h.b16 %v81
    %v356 = vunpack.c.l.b16 %v82
    %v357 = vunpack.c.h.b16 %v82
    %v358 = vunpack.c.l.b16 %v83
    %v359 = vunpack.c.h.b16 %v83
    %v360 = vunpack.c.l.b16 %v84
    %v361 = vunpack.c.h.b16 %v84
    %v362 = vunpack.c.l.b16 %v85
    %v363 = vunpack.c.h.b16 %v85
    %v364 = vunpack.c.l.b16 %v86
    %v365 = vunpack.c.h.b16 %v86
    %v366 = vunpack.c.l.b16 %v87
    %v367 = vunpack.c.h.b16 %v87
    %v368 = vunpack.c.l.b16 %v88
    %v369 = vunpack.c.h.b16 %v88
    %v370 = vunpack.c.l.b16 %v89
    %v371 = vunpack.c.h.b16 %v89
    %v372 = vunpack.c.l.b16 %v90
    %v373 = vunpack.c.h.b16 %v90
    %v374 = vunpack.c.l.b16 %v91
    %v375 = vunpack.c.h.b16 %v91
    %v376 = vunpack.c.l.b16 %v92
    %v377 = vunpack.c.h.b16 %v92
    %v378 = vunpack.c.l.b16 %v93
    %v379 = vunpack.c.h.b16 %v93
    %v380 = vunpack.c.l.b16 %v94
    %v381 = vunpack.c.h.b16 %v94
    %v382 = vunpack.c.l.b16 %v95
    %v383 = vunpack.c.h.b16 %v95
    %v384 = vunpack.c.l.b16 %v96
    %v385 = vunpack.c.h.b16 %v96
    %v386 = vunpack.c.l.b16 %v97
    %v387 = vunpack.c.h.b16 %v97
    %v388 = vunpack.c.l.b16 %v98
    %v389 = vunpack.c.h.b16 %v98
    %v390 = vunpack.c.l.b16 %v99
    %v391 = vunpack.c.h.b16 %v99
    %v392 = vunpack.c.l.b16 %v100
    %v393 = vunpack.c.h.b16 %v100
    %v394 = vunpack.c.l.b16 %v101
    %v395 = vunpack.c.h.b16 %v101
    %v396 = vunpack.c.l.b16 %v102
    %v397 = vunpack.c.h.b16 %v102
    %v398 = vunpack.c.l.b16 %v103
    %v399 = vunpack.c.h.b16 %v103
    %v400 = vunpack.c.l.b16 %v104
    %v401 = vunpack.c.h.b16 %v104
    %v402 = vunpack.c.l.b16 %v105
    %v403 = vunpack.c.h.b16 %v105
    %v404 = vunpack.c.l.b16 %v106
    %v405 = vunpack.c.h.b16 %v106
    %v406 = vunpack.c.l.b16 %v107
    %v407 = vunpack.c.h.b16 %v107
    %v408 = vunpack.c.l.b16 %v108
    %v409 = vunpack.c.h.b16 %v108
    %v410 = vunpack.c.l.b16 %v109
    %v411 = vunpack.c.h.b16 %v109
    %v412 = vunpack.c.l.b16 %v110
    %v413 = vunpack.c.h.b16 %v110
    %v414 = vunpack.c.l.b16 %v111
    %v415 = vunpack.c.h.b16 %v111
    %v416 = vunpack.c.l.b16 %v112
    %v417 = vunpack.c.h.b16 %v112
    %v418 = vunpack.c.l.b16 %v113
    %v419 = vunpack.c.h.b16 %v113
    %v420 = vunpack.c.l.b16 %v114
    %v421 = vunpack.c.h.b16 %v114
    %v422 = vunpack.c.l.b16 %v115
    %v423 = vunpack.c.h.b16 %v115
    %v424 = vunpack.c.l.b16 %v116
    %v425 = vunpack.c.h.b16 %v116
    %v426 = vunpack.c.l.b16 %v117
    %v427 = vunpack.c.h.b16 %v117
    %v428 = vunpack.c.l.b16 %v118
    %v429 = vunpack.c.h.b16 %v118
    %v430 = vunpack.c.l.b16 %v119
    %v431 = vunpack.c.h.b16 %v119
    %v432 = vunpack.c.l.b16 %v120
    %v433 = vunpack.c.h.b16 %v120
    %v434 = vunpack.c.l.b16 %v121
    %v435 = vunpack.c.h.b16 %v121
    %v436 = vunpack.c.l.b16 %v122
    %v437 = vunpack.c.h.b16 %v122
    %v438 = vunpack.c.l.b16 %v123
    %v439 = vunpack.c.h.b16 %v123
    %v440 = vunpack.c.l.b16 %v124
    %v441 = vunpack.c.h.b16 %v124
    %v442 = vunpack.c.l.b16 %v125
    %v443 = vunpack.c.h.b16 %v125
    %v444 = vunpack.c.l.b16 %v126
    %v445 = vunpack.c.h.b16 %v126
    %v446 = vunpack.c.l.b16 %v127
    %v447 = vunpack.c.h.b16 %v127
    %v448 = vunpack.c.l.b16 %v128
    %v449 = vunpack.c.h.b16 %v128
    %v450 = vunpack.c.l.b16 %v129
    %v451 = vunpack.c.h.b16 %v129
    %v452 = vunpack.c.l.b16 %v130
    %v453 = vunpack.c.h.b16 %v130
    %v454 = vunpack.c.l.b16 %v131
    %v455 = vunpack.c.h.b16 %v131
    %v456 = vunpack.c.l.b16 %v132
    %v457 = vunpack.c.h.b16 %v132
    %v458 = vunpack.c.l.b16 %v133
    %v459 = vunpack.c.h.b16 %v133
    %v460 = vunpack.c.l.b16 %v134
    %v461 = vunpack.c.h.b16 %v134
    %v462 = vunpack.c.l.b16 %v135
    %v463 = vunpack.c.h.b16 %v135
    %v464 = vunpack.c.l.b16 %v136
    %v465 = vunpack.c.h.b16 %v136
    %v466 = vunpack.c.l.b16 %v137
    %v467 = vunpack.c.h.b16 %v137
    %v468 = vunpack.c.l.b16 %v138
    %v469 = vunpack.c.h.b16 %v138
    %v470 = vunpack.c.l.b16 %v139
    %v471 = vunpack.c.h.b16 %v139
    %v472 = vunpack.c.l.b16 %v140
    %v473 = vunpack.c.h.b16 %v140
    %v474 = vunpack.c.l.b16 %v141
    %v475 = vunpack.c.h.b16 %v141
    %v476 = vunpack.c.l.b16 %v142
    %v477 = vunpack.c.h.b16 %v142
    %v478 = vunpack.c.l.b16 %v143
    %v479 = vunpack.c.h.b16 %v143
    %v480 = vunpack.c.l.b16 %v144
    %v481 = vunpack.c.h.b16 %v144
    %v482 = vunpack.c.l.b16 %v145
    %v483 = vunpack.c.h.b16 %v145
    %v484 = vunpack.c.l.b16 %v146
    %v485 = vunpack.c.h.b16 %v146
    %v486 = vunpack.c.l.b16 %v147
    %v487 = vunpack.c.h.b16 %v147
    %v488 = vunpack.c.l.b16 %v148
    %v489 = vunpack.c.h.b16 %v148
    %v490 = vunpack.c.l.b16 %v149
    %v491 = vunpack.c.h.b16 %v149
    %v492 = vunpack.c.l.b16 %v150
    %v493 = vunpack.c.h.b16 %v150
    %v494 = vunpack.c.l.b16 %v151
    %v495 = vunpack.c.h.b16 %v151
    %v496 = vunpack.c.l.b16 %v152
    %v497 = vunpack.c.h.b16 %v152
    %v498 = vunpack.c.l.b16 %v153
    %v499 = vunpack.c.h.b16 %v153
    %v500 = vunpack.c.l.b16 %v154
    %v501 = vunpack.c.h.b16 %v154
    %v502 = vunpack.c.l.b16 %v155
    %v503 = vunpack.c.h.b16 %v155
    %v504 = vunpack.c.l.b16 %v156
    %v505 = vunpack.c.h.b16 %v156
    %v506 = vunpack.c.l.b16 %v157
    %v507 = vunpack.c.h.b16 %v157
    %v508 = vunpack.c.l.b16 %v158
    %v509 = vunpack.c.h.b16 %v158
    %v510 = vunpack.c.l.b16 %v159
    %v511 = vunpack.c.h.b16 %v159
    %v512 = vunpack.c.l.b16 %v160
    %v513 = vunpack.c.h.b16 %v160
    %v514 = vunpack.c.l.b16 %v161
    %v515 = vunpack.c.h.b16 %v161
    %v516 = vunpack.c.l.b16 %v162
    %v517 = vunpack.c.h.b16 %v162
    %v518 = vunpack.c.l.b16 %v163
    %v519 = vunpack.c.h.b16 %v163
    %v520 = vunpack.c.l.b16 %v164
    %v521 = vunpack.c.h.b16 %v164
    %v522 = vunpack.c.l.b16 %v165
    %v523 = vunpack.c.h.b16 %v165
    %v524 = vunpack.c.l.b16 %v166
    %v525 = vunpack.c.h.b16 %v166
    %v526 = vunpack.c.l.b16 %v167
    %v527 = vunpack.c.h.b16 %v167
    %v528 = vunpack.c.l.b16 %v168
    %v529 = vunpack.c.h.b16 %v168
    %v530 = vunpack.c.l.b16 %v169
    %v531 = vunpack.c.h.b16 %v169
    %v532 = vunpack.c.l.b16 %v170
    %v533 = vunpack.c.h.b16 %v170
    %v534 = vunpack.c.l.b16 %v171
    %v535 = vunpack.c.h.b16 %v171
    %v536 = vunpack.c.l.b16 %v172
    %v537 = vunpack.c.h.b16 %v172
    %v538 = vunpack.c.l.b16 %v173
    %v539 = vunpack.c.h.b16 %v173
    %v540 = vunpack.c.l.b16 %v174
    %v541 = vunpack.c.h.b16 %v174
    %v542 = vunpack.c.l.b16 %v175
    %v543 = vunpack.c.h.b16 %v175
    %v544 = vunpack.c.l.b16 %v176
    %v545 = vunpack.c.h.b16 %v176
    %v546 = vunpack.c.l.b16 %v177
    %v547 = vunpack.c.h.b16 %v177
    %v548 = vunpack.c.l.b16 %v178
    %v549 = vunpack.c.h.b16 %v178
    %v550 = vunpack.c.l.b16 %v179
    %v551 = vunpack.c.h.b16 %v179
    %v552 = vunpack.c.l.b16 %v180
    %v553 = vunpack.c.h.b16 %v180
    %v554 = vunpack.c.l.b16 %v181
    %v555 = vunpack.c.h.b16 %v181
    %v556 = vunpack.c.l.b16 %v182
    %v557 = vunpack.c.h.b16 %v182
    %v558 = vunpack.c.l.b16 %v183
    %v559 = vunpack.c.h.b16 %v183
    %v560 = vunpack.c.l.b16 %v184
    %v561 = vunpack.c.h.b16 %v184
    %v562 = vunpack.c.l.b16 %v185
    %v563 = vunpack.c.h.b16 %v185
    %v564 = vunpack.c.l.b16 %v186
    %v565 = vunpack.c.h.b16 %v186
    %v566 = vunpack.c.l.b16 %v187
    %v567 = vunpack.c.h.b16 %v187
    %v568 = vunpack.c.l.b16 %v188
    %v569 = vunpack.c.h.b16 %v188
    %v570 = vunpack.c.l.b16 %v189
    %v571 = vunpack.c.h.b16 %v189
    %v572 = vunpack.c.l.b16 %v190
    %v573 = vunpack.c.h.b16 %v190
    %v574 = vunpack.c.l.b16 %v191
    %v575 = vunpack.c.h.b16 %v191
    %v576 = vunpack.c.l.b16 %v192
    %v577 = vunpack.c.h.b16 %v192
    %v578 = vunpack.c.l.b16 %v193
    %v579 = vunpack.c.h.b16 %v193
    %v580 = vunpack.c.l.b16 %v194
    %v581 = vunpack.c.h.b16 %v194
    %v582 = vunpack.c.l.b16 %v195
    %v583 = vunpack.c.h.b16 %v195
    %v584 = vunpack.c.l.b16 %v196
    %v585 = vunpack.c.h.b16 %v196
    %v586 = vunpack.c.l.b16 %v197
    %v587 = vunpack.c.h.b16 %v197
    %v588 = vunpack.c.l.b16 %v198
    %v589 = vunpack.c.h.b16 %v198
    %v590 = vunpack.c.l.b16 %v199
    %v591 = vunpack.c.h.b16 %v199
    %v592 = vunpack.c.l.b16 %v200
    %v593 = vunpack.c.h.b16 %v200
    %v594 = vunpack.c.l.b16 %v201
    %v595 = vunpack.c.h.b16 %v201
    %v596 = vunpack.c.l.b16 %v202
    %v597 = vunpack.c.h.b16 %v202
    %v598 = vunpack.c.l.b16 %v203
    %v599 = vunpack.c.h.b16 %v203
    %v600 = vpack.c.b16 %v346, %v344
    %v601 = vpack.c.b16 %v347, %v345
    %v602 = vpack.c.b16 %v350, %v348
    %v603 = vpack.c.b16 %v351, %v349
    %v604 = vpack.c.b16 %v354, %v352
    %v605 = vpack.c.b16 %v355, %v353
    %v606 = vpack.c.b16 %v358, %v356
    %v607 = vpack.c.b16 %v359, %v357
    %v608 = vpack.c.b16 %v362, %v360
    %v609 = vpack.c.b16 %v363, %v361
    %v610 = vpack.c.b16 %v366, %v364
    %v611 = vpack.c.b16 %v367, %v365
    %v612 = vpack.c.b16 %v370, %v368
    %v613 = vpack.c.b16 %v371, %v369
    %v614 = vpack.c.b16 %v374, %v372
    %v615 = vpack.c.b16 %v375, %v373
    %v616 = vpack.c.b16 %v378, %v376
    %v617 = vpack.c.b16 %v379, %v377
    %v618 = vpack.c.b16 %v382, %v380
    %v619 = vpack.c.b16 %v383, %v381
    %v620 = vpack.c.b16 %v386, %v384
    %v621 = vpack.c.b16 %v387, %v385
    %v622 = vpack.c.b16 %v390, %v388
    %v623 = vpack.c.b16 %v391, %v389
    %v624 = vpack.c.b16 %v394, %v392
    %v625 = vpack.c.b16 %v395, %v393
    %v626 = vpack.c.b16 %v398, %v396
    %v627 = vpack.c.b16 %v399, %v397
    %v628 = vpack.c.b16 %v402, %v400
    %v629 = vpack.c.b16 %v403, %v401
    %v630 = vpack.c.b16 %v406, %v404
    %v631 = vpack.c.b16 %v407, %v405
    %v632 = vpack.c.b16 %v410, %v408
    %v633 = vpack.c.b16 %v411, %v409
    %v634 = vpack.c.b16 %v414, %v412
    %v635 = vpack.c.b16 %v415, %v413
    %v636 = vpack.c.b16 %v418, %v416
    %v637 = vpack.c.b16 %v419, %v417
    %v638 = vpack.c.b16 %v422, %v420
    %v639 = vpack.c.b16 %v423, %v421
    %v640 = vpack.c.b16 %v426, %v424
    %v641 = vpack.c.b16 %v427, %v425
    %v642 = vpack.c.b16 %v430, %v428
    %v643 = vpack.c.b16 %v431, %v429
    %v644 = vpack.c.b16 %v434, %v432
    %v645 = vpack.c.b16 %v435, %v433
    %v646 = vpack.c.b16 %v438, %v436
    %v647 = vpack.c.b16 %v439, %v437
    %v648 = vpack.c.b16 %v442, %v440
    %v649 = vpack.c.b16 %v443, %v441
    %v650 = vpack.c.b16 %v446, %v444
    %v651 = vpack.c.b16 %v447, %v445
    %v652 = vpack.c.b16 %v450, %v448
    %v653 = vpack.c.b16 %v451, %v449
    %v654 = vpack.c.b16 %v454, %v452
    %v655 = vpack.c.b16 %v455, %v453
    %v656 = vpack.c.b16 %v458, %v456
    %v657 = vpack.c.b16 %v459, %v457
    %v658 = vpack.c.b16 %v462, %v460
    %v659 = vpack.c.b16 %v463, %v461
    %v660 = vpack.c.b16 %v466, %v464
    %v661 = vpack.c.b16 %v467, %v465
    %v662 = vpack.c.b16 %v470, %v468
    %v663 = vpack.c.b16 %v471, %v469
    %v664 = vpack.c.b16 %v474, %v472
    %v665 = vpack.c.b16 %v475, %v473
    %v666 = vpack.c.b16 %v478, %v476
    %v667 = vpack.c.b16 %v479, %v477
    %v668 = vpack.c.b16 %v482, %v480
    %v669 = vpack.c.b16 %v483, %v481
    %v670 = vpack.c.b16 %v486, %v484
    %v671 = vpack.c.b16 %v487, %v485
    %v672 = vpack.c.b16 %v490, %v488
    %v673 = vpack.c.b16 %v491, %v489
    %v674 = vpack.c.b16 %v494, %v492
    %v675 = vpack.c.b16 %v495, %v493
    %v676 = vpack.c.b16 %v498, %v496
    %v677 = vpack.c.b16 %v499, %v497
    %v678 = vpack.c.b16 %v502, %v500
    %v679 = vpack.c.b16 %v503, %v501
    %v680 = vpack.c.b16 %v506, %v504
    %v681 = vpack.c.b16 %v507, %v505
    %v682 = vpack.c.b16 %v510, %v508
    %v683 = vpack.c.b16 %v511, %v509
    %v684 = vpack.c.b16 %v514, %v512
    %v685 = vpack.c.b16 %v515, %v513
    %v686 = vpack.c.b16 %v518, %v516
    %v687 = vpack.c.b16 %v519, %v517
    %v688 = vpack.c.b16 %v522, %v520
    %v689 = vpack.c.b16 %v523, %v521
    %v690 = vpack.c.b16 %v526, %v524
    %v691 = vpack.c.b16 %v527, %v525
    %v692 = vpack.c.b16 %v530, %v528
    %v693 = vpack.c.b16 %v531, %v529
    %v694 = vpack.c.b16 %v534, %v532
    %v695 = vpack.c.b16 %v535, %v533
    %v696 = vpack.c.b16 %v538, %v536
    %v697 = vpack.c.b16 %v539, %v537
    %v698 = vpack.c.b16 %v542, %v540
    %v699 = vpack.c.b16 %v543, %v541
    %v700 = vpack.c.b16 %v546, %v544
    %v701 = vpack.c.b16 %v547, %v545
    %v702 = vpack.c.b16 %v550, %v548
    %v703 = vpack.c.b16 %v551, %v549
    %v704 = vpack.c.b16 %v554, %v552
    %v705 = vpack.c.b16 %v555, %v553
    %v706 = vpack.c.b16 %v558, %v556
    %v707 = vpack.c.b16 %v559, %v557
    %v708 = vpack.c.b16 %v562, %v560
    %v709 = vpack.c.b16 %v563, %v561
    %v710 = vpack.c.b16 %v566, %v564
    %v711 = vpack.c.b16 %v567, %v565
    %v712 = vpack.c.b16 %v570, %v568
    %v713 = vpack.c.b16 %v571, %v569
    %v714 = vpack.c.b16 %v574, %v572
    %v715 = vpack.c.b16 %v575, %v573
    %v716 = vpack.c.b16 %v578, %v576
    %v717 = vpack.c.b16 %v579, %v577
    %v718 = vpack.c.b16 %v582, %v580
    %v719 = vpack.c.b16 %v583, %v581
    %v720 = vpack.c.b16 %v586, %v584
    %v721 = vpack.c.b16 %v587, %v585
    %v722 = vpack.c.b16 %v590, %v588
    %v723 = vpack.c.b16 %v591, %v589
    %v724 = vpack.c.b16 %v594, %v592
    %v725 = vpack.c.b16 %v595, %v593
    %v726 = vpack.c.b16 %v598, %v596
    %v727 = vpack.c.b16 %v599, %v597
    %856 = vmatprep.subr.bf16.mxu0 %v601
    %857 = vmatpush1.bf16.msra.mxu0 %v600
    %858 = vmatprep.subr.bf16.mxu0 %v603
    %859 = vmatpush1.bf16.msra.mxu0 %v602
    %860 = vmatprep.subr.bf16.mxu0 %v605
    %861 = vmatpush1.bf16.msra.mxu0 %v604
    %862 = vmatprep.subr.bf16.mxu0 %v607
    %863 = vmatpush1.bf16.msra.mxu0 %v606
    %864 = vmatprep.subr.bf16.mxu0 %v609
    %865 = vmatpush1.bf16.msra.mxu0 %v608
    %866 = vmatprep.subr.bf16.mxu0 %v611
    %867 = vmatpush1.bf16.msra.mxu0 %v610
    %868 = vmatprep.subr.bf16.mxu0 %v613
    %869 = vmatpush1.bf16.msra.mxu0 %v612
    %870 = vmatprep.subr.bf16.mxu0 %v615
    %871 = vmatpush1.bf16.msra.mxu0 %v614
    %872 = vmatprep.subr.bf16.mxu0 %v617
    %873 = vmatpush1.bf16.msra.mxu0 %v616
    %874 = vmatprep.subr.bf16.mxu0 %v619
    %875 = vmatpush1.bf16.msra.mxu0 %v618
    %876 = vmatprep.subr.bf16.mxu0 %v621
    %877 = vmatpush1.bf16.msra.mxu0 %v620
    %878 = vmatprep.subr.bf16.mxu0 %v623
    %879 = vmatpush1.bf16.msra.mxu0 %v622
    %880 = vmatprep.subr.bf16.mxu0 %v625
    %881 = vmatpush1.bf16.msra.mxu0 %v624
    %882 = vmatprep.subr.bf16.mxu0 %v627
    %883 = vmatpush1.bf16.msra.mxu0 %v626
    %884 = vmatprep.subr.bf16.mxu0 %v629
    %885 = vmatpush1.bf16.msra.mxu0 %v628
    %886 = vmatprep.subr.bf16.mxu0 %v631
    %887 = vmatpush1.bf16.msra.mxu0 %v630
    %888 = vmatprep.mubr.bf16.mxu0 %v69
    %889 = vmatmul.mubr.bf16.gmra.mrb[0].mxu0 %v68
    %v890 = vpop.f32.mrb[0].mxu0
    %v891 = vadd.f32 %v209, %v890
    %v892 = vpop.f32.mrb[0].mxu0
    %v893 = vadd.f32 %v213, %v892
    %v894 = vpop.f32.mrb[0].mxu0
    %v895 = vadd.f32 %v209, %v894
    %v896 = vpop.f32.mrb[0].mxu0
    %v897 = vadd.f32 %v213, %v896
    %898 = vdwg.mxu0
    %899 = vmatprep.subr.bf16.mxu0 %v633
    %900 = vmatpush1.bf16.msra.mxu0 %v632
    %901 = vmatprep.subr.bf16.mxu0 %v635
    %902 = vmatpush1.bf16.msra.mxu0 %v634
    %903 = vmatprep.subr.bf16.mxu0 %v637
    %904 = vmatpush1.bf16.msra.mxu0 %v636
    %905 = vmatprep.subr.bf16.mxu0 %v639
    %906 = vmatpush1.bf16.msra.mxu0 %v638
    %907 = vmatprep.subr.bf16.mxu0 %v641
    %908 = vmatpush1.bf16.msra.mxu0 %v640
    %909 = vmatprep.subr.bf16.mxu0 %v643
    %910 = vmatpush1.bf16.msra.mxu0 %v642
    %911 = vmatprep.subr.bf16.mxu0 %v645
    %912 = vmatpush1.bf16.msra.mxu0 %v644
    %913 = vmatprep.subr.bf16.mxu0 %v647
    %914 = vmatpush1.bf16.msra.mxu0 %v646
    %915 = vmatprep.subr.bf16.mxu0 %v649
    %916 = vmatpush1.bf16.msra.mxu0 %v648
    %917 = vmatprep.subr.bf16.mxu0 %v651
    %918 = vmatpush1.bf16.msra.mxu0 %v650
    %919 = vmatprep.subr.bf16.mxu0 %v653
    %920 = vmatpush1.bf16.msra.mxu0 %v652
    %921 = vmatprep.subr.bf16.mxu0 %v655
    %922 = vmatpush1.bf16.msra.mxu0 %v654
    %923 = vmatprep.subr.bf16.mxu0 %v657
    %924 = vmatpush1.bf16.msra.mxu0 %v656
    %925 = vmatprep.subr.bf16.mxu0 %v659
    %926 = vmatpush1.bf16.msra.mxu0 %v658
    %927 = vmatprep.subr.bf16.mxu0 %v661
    %928 = vmatpush1.bf16.msra.mxu0 %v660
    %929 = vmatprep.subr.bf16.mxu0 %v663
    %930 = vmatpush1.bf16.msra.mxu0 %v662
    %931 = vmatprep.mubr.bf16.mxu0 %v71
    %932 = vmatmul.mubr.bf16.gmra.mrb[0].mxu0 %v70
    %v933 = vpop.f32.mrb[0].mxu0
    %v934 = vadd.f32 %v891, %v933
    %v935 = vpop.f32.mrb[0].mxu0
    %v936 = vadd.f32 %v893, %v935
    %v937 = vpop.f32.mrb[0].mxu0
    %v938 = vadd.f32 %v895, %v937
    %v939 = vpop.f32.mrb[0].mxu0
    %v940 = vadd.f32 %v897, %v939
    %941 = vdwg.mxu0
    %942 = vmatprep.subr.bf16.mxu0 %v665
    %943 = vmatpush1.bf16.msra.mxu0 %v664
    %944 = vmatprep.subr.bf16.mxu0 %v667
    %945 = vmatpush1.bf16.msra.mxu0 %v666
    %946 = vmatprep.subr.bf16.mxu0 %v669
    %947 = vmatpush1.bf16.msra.mxu0 %v668
    %948 = vmatprep.subr.bf16.mxu0 %v671
    %949 = vmatpush1.bf16.msra.mxu0 %v670
    %950 = vmatprep.subr.bf16.mxu0 %v673
    %951 = vmatpush1.bf16.msra.mxu0 %v672
    %952 = vmatprep.subr.bf16.mxu0 %v675
    %953 = vmatpush1.bf16.msra.mxu0 %v674
    %954 = vmatprep.subr.bf16.mxu0 %v677
    %955 = vmatpush1.bf16.msra.mxu0 %v676
    %956 = vmatprep.subr.bf16.mxu0 %v679
    %957 = vmatpush1.bf16.msra.mxu0 %v678
    %958 = vmatprep.subr.bf16.mxu0 %v681
    %959 = vmatpush1.bf16.msra.mxu0 %v680
    %960 = vmatprep.subr.bf16.mxu0 %v683
    %961 = vmatpush1.bf16.msra.mxu0 %v682
    %962 = vmatprep.subr.bf16.mxu0 %v685
    %963 = vmatpush1.bf16.msra.mxu0 %v684
    %964 = vmatprep.subr.bf16.mxu0 %v687
    %965 = vmatpush1.bf16.msra.mxu0 %v686
    %966 = vmatprep.subr.bf16.mxu0 %v689
    %967 = vmatpush1.bf16.msra.mxu0 %v688
    %968 = vmatprep.subr.bf16.mxu0 %v691
    %969 = vmatpush1.bf16.msra.mxu0 %v690
    %970 = vmatprep.subr.bf16.mxu0 %v693
    %971 = vmatpush1.bf16.msra.mxu0 %v692
    %972 = vmatprep.subr.bf16.mxu0 %v695
    %973 = vmatpush1.bf16.msra.mxu0 %v694
    %974 = vmatprep.mubr.bf16.mxu0 %v73
    %975 = vmatmul.mubr.bf16.gmra.mrb[0].mxu0 %v72
    %v976 = vpop.f32.mrb[0].mxu0
    %v977 = vadd.f32 %v934, %v976
    %v978 = vpop.f32.mrb[0].mxu0
    %v979 = vadd.f32 %v936, %v978
    %v980 = vpop.f32.mrb[0].mxu0
    %v981 = vadd.f32 %v938, %v980
    %v982 = vpop.f32.mrb[0].mxu0
    %v983 = vadd.f32 %v940, %v982
    %984 = vdwg.mxu0
    %985 = vmatprep.subr.bf16.mxu0 %v697
    %986 = vmatpush1.bf16.msra.mxu0 %v696
    %987 = vmatprep.subr.bf16.mxu0 %v699
    %988 = vmatpush1.bf16.msra.mxu0 %v698
    %989 = vmatprep.subr.bf16.mxu0 %v701
    %990 = vmatpush1.bf16.msra.mxu0 %v700
    %991 = vmatprep.subr.bf16.mxu0 %v703
    %992 = vmatpush1.bf16.msra.mxu0 %v702
    %993 = vmatprep.subr.bf16.mxu0 %v705
    %994 = vmatpush1.bf16.msra.mxu0 %v704
    %995 = vmatprep.subr.bf16.mxu0 %v707
    %996 = vmatpush1.bf16.msra.mxu0 %v706
    %997 = vmatprep.subr.bf16.mxu0 %v709
    %998 = vmatpush1.bf16.msra.mxu0 %v708
    %999 = vmatprep.subr.bf16.mxu0 %v711
    %1000 = vmatpush1.bf16.msra.mxu0 %v710
    %1001 = vmatprep.subr.bf16.mxu0 %v713
    %1002 = vmatpush1.bf16.msra.mxu0 %v712
    %1003 = vmatprep.subr.bf16.mxu0 %v715
    %1004 = vmatpush1.bf16.msra.mxu0 %v714
    %1005 = vmatprep.subr.bf16.mxu0 %v717
    %1006 = vmatpush1.bf16.msra.mxu0 %v716
    %1007 = vmatprep.subr.bf16.mxu0 %v719
    %1008 = vmatpush1.bf16.msra.mxu0 %v718
    %1009 = vmatprep.subr.bf16.mxu0 %v721
    %1010 = vmatpush1.bf16.msra.mxu0 %v720
    %1011 = vmatprep.subr.bf16.mxu0 %v723
    %1012 = vmatpush1.bf16.msra.mxu0 %v722
    %1013 = vmatprep.subr.bf16.mxu0 %v725
    %1014 = vmatpush1.bf16.msra.mxu0 %v724
    %1015 = vmatprep.subr.bf16.mxu0 %v727
    %1016 = vmatpush1.bf16.msra.mxu0 %v726
    %1017 = vmatprep.mubr.bf16.mxu0 %v75
    %1018 = vmatmul.mubr.bf16.gmra.mrb[0].mxu0 %v74
    %v1019 = vpop.f32.mrb[0].mxu0
    %v1020 = vadd.f32 %v977, %v1019
    %v1021 = vpop.f32.mrb[0].mxu0
    %v1022 = vadd.f32 %v979, %v1021
    %v1023 = vpop.f32.mrb[0].mxu0
    %v1024 = vadd.f32 %v981, %v1023
    %v1025 = vpop.f32.mrb[0].mxu0
    %v1026 = vadd.f32 %v983, %v1025
    %1027 = vdwg.mxu0
    %v1028 = vmax.f32 %v1020, 0.0
    %v1029 = vmax.f32 %v1022, 0.0
    %v1030 = vmax.f32 %v1024, 0.0
    %v1031 = vmax.f32 %v1026, 0.0
    %v1032 = vpack.c.bf16 %v1030, %v1028
    %v1033 = vpack.c.bf16 %v1031, %v1029
    %v1034 = vld [vmem:[#allocation4] sm:$0xff]
    %v1035 = vld [vmem:[#allocation4 + $0x8] sm:$0xff]
    %v1036 = vld [vmem:[#allocation4 + $0x10] sm:$0xff]
    %v1037 = vld [vmem:[#allocation4 + $0x18] sm:$0xff]
    %v1038 = vld [vmem:[#allocation4 + $0x20] sm:$0xff]
    %v1039 = vld [vmem:[#allocation4 + $0x28] sm:$0xff]
    %v1040 = vld [vmem:[#allocation4 + $0x30] sm:$0xff]
    %v1041 = vld [vmem:[#allocation4 + $0x38] sm:$0xff]
    %v1042 = vld [vmem:[#allocation4 + $0x40] sm:$0xff]
    %v1043 = vld [vmem:[#allocation4 + $0x48] sm:$0xff]
    %v1044 = vld [vmem:[#allocation4 + $0x50] sm:$0xff]
    %v1045 = vld [vmem:[#allocation4 + $0x58] sm:$0xff]
    %v1046 = vld [vmem:[#allocation4 + $0x60] sm:$0xff]
    %v1047 = vld [vmem:[#allocation4 + $0x68] sm:$0xff]
    %v1048 = vld [vmem:[#allocation4 + $0x70] sm:$0xff]
    %v1049 = vld [vmem:[#allocation4 + $0x78] sm:$0xff]
    %v1050 = vld [vmem:[#allocation4 + $0x80] sm:$0xff]
    %v1051 = vld [vmem:[#allocation4 + $0x88] sm:$0xff]
    %v1052 = vld [vmem:[#allocation4 + $0x90] sm:$0xff]
    %v1053 = vld [vmem:[#allocation4 + $0x98] sm:$0xff]
    %v1054 = vld [vmem:[#allocation4 + $0xa0] sm:$0xff]
    %v1055 = vld [vmem:[#allocation4 + $0xa8] sm:$0xff]
    %v1056 = vld [vmem:[#allocation4 + $0xb0] sm:$0xff]
    %v1057 = vld [vmem:[#allocation4 + $0xb8] sm:$0xff]
    %v1058 = vld [vmem:[#allocation4 + $0xc0] sm:$0xff]
    %v1059 = vld [vmem:[#allocation4 + $0xc8] sm:$0xff]
    %v1060 = vld [vmem:[#allocation4 + $0xd0] sm:$0xff]
    %v1061 = vld [vmem:[#allocation4 + $0xd8] sm:$0xff]
    %v1062 = vld [vmem:[#allocation4 + $0xe0] sm:$0xff]
    %v1063 = vld [vmem:[#allocation4 + $0xe8] sm:$0xff]
    %v1064 = vld [vmem:[#allocation4 + $0xf0] sm:$0xff]
    %v1065 = vld [vmem:[#allocation4 + $0xf8] sm:$0xff]
    %s1066 = scalar_lea.vmem %s4, 1
    %v1067 = vld [vmem:[%s1066] ss:$2 sm:$0x3]
    %v1069 = vlaneseq
    %v1070 = vshrl.u32 %v1069, 7
    %v1071 = vsub.s32 0, %v1070
    %v1072 = vrot.slane %v1067, %v1071
    %v1073 = vlaneseq
    %v1074 = vshrl.u32 %v1073, 7
    %v1075 = vsub.s32 1, %v1074
    %v1076 = vrot.slane %v1067, %v1075
    %v1111 = vunpack.c.l.b16 %v1034
    %v1112 = vunpack.c.h.b16 %v1034
    %v1113 = vunpack.c.l.b16 %v1035
    %v1114 = vunpack.c.h.b16 %v1035
    %v1115 = vunpack.c.l.b16 %v1036
    %v1116 = vunpack.c.h.b16 %v1036
    %v1117 = vunpack.c.l.b16 %v1037
    %v1118 = vunpack.c.h.b16 %v1037
    %v1119 = vunpack.c.l.b16 %v1038
    %v1120 = vunpack.c.h.b16 %v1038
    %v1121 = vunpack.c.l.b16 %v1039
    %v1122 = vunpack.c.h.b16 %v1039
    %v1123 = vunpack.c.l.b16 %v1040
    %v1124 = vunpack.c.h.b16 %v1040
    %v1125 = vunpack.c.l.b16 %v1041
    %v1126 = vunpack.c.h.b16 %v1041
    %v1127 = vunpack.c.l.b16 %v1042
    %v1128 = vunpack.c.h.b16 %v1042
    %v1129 = vunpack.c.l.b16 %v1043
    %v1130 = vunpack.c.h.b16 %v1043
    %v1131 = vunpack.c.l.b16 %v1044
    %v1132 = vunpack.c.h.b16 %v1044
    %v1133 = vunpack.c.l.b16 %v1045
    %v1134 = vunpack.c.h.b16 %v1045
    %v1135 = vunpack.c.l.b16 %v1046
    %v1136 = vunpack.c.h.b16 %v1046
    %v1137 = vunpack.c.l.b16 %v1047
    %v1138 = vunpack.c.h.b16 %v1047
    %v1139 = vunpack.c.l.b16 %v1048
    %v1140 = vunpack.c.h.b16 %v1048
    %v1141 = vunpack.c.l.b16 %v1049
    %v1142 = vunpack.c.h.b16 %v1049
    %v1143 = vunpack.c.l.b16 %v1050
    %v1144 = vunpack.c.h.b16 %v1050
    %v1145 = vunpack.c.l.b16 %v1051
    %v1146 = vunpack.c.h.b16 %v1051
    %v1147 = vunpack.c.l.b16 %v1052
    %v1148 = vunpack.c.h.b16 %v1052
    %v1149 = vunpack.c.l.b16 %v1053
    %v1150 = vunpack.c.h.b16 %v1053
    %v1151 = vunpack.c.l.b16 %v1054
    %v1152 = vunpack.c.h.b16 %v1054
    %v1153 = vunpack.c.l.b16 %v1055
    %v1154 = vunpack.c.h.b16 %v1055
    %v1155 = vunpack.c.l.b16 %v1056
    %v1156 = vunpack.c.h.b16 %v1056
    %v1157 = vunpack.c.l.b16 %v1057
    %v1158 = vunpack.c.h.b16 %v1057
    %v1159 = vunpack.c.l.b16 %v1058
    %v1160 = vunpack.c.h.b16 %v1058
    %v1161 = vunpack.c.l.b16 %v1059
    %v1162 = vunpack.c.h.b16 %v1059
    %v1163 = vunpack.c.l.b16 %v1060
    %v1164 = vunpack.c.h.b16 %v1060
    %v1165 = vunpack.c.l.b16 %v1061
    %v1166 = vunpack.c.h.b16 %v1061
    %v1167 = vunpack.c.l.b16 %v1062
    %v1168 = vunpack.c.h.b16 %v1062
    %v1169 = vunpack.c.l.b16 %v1063
    %v1170 = vunpack.c.h.b16 %v1063
    %v1171 = vunpack.c.l.b16 %v1064
    %v1172 = vunpack.c.h.b16 %v1064
    %v1173 = vunpack.c.l.b16 %v1065
    %v1174 = vunpack.c.h.b16 %v1065
    %v1175 = vpack.c.b16 %v1113, %v1111
    %v1176 = vpack.c.b16 %v1114, %v1112
    %v1177 = vpack.c.b16 %v1117, %v1115
    %v1178 = vpack.c.b16 %v1118, %v1116
    %v1179 = vpack.c.b16 %v1121, %v1119
    %v1180 = vpack.c.b16 %v1122, %v1120
    %v1181 = vpack.c.b16 %v1125, %v1123
    %v1182 = vpack.c.b16 %v1126, %v1124
    %v1183 = vpack.c.b16 %v1129, %v1127
    %v1184 = vpack.c.b16 %v1130, %v1128
    %v1185 = vpack.c.b16 %v1133, %v1131
    %v1186 = vpack.c.b16 %v1134, %v1132
    %v1187 = vpack.c.b16 %v1137, %v1135
    %v1188 = vpack.c.b16 %v1138, %v1136
    %v1189 = vpack.c.b16 %v1141, %v1139
    %v1190 = vpack.c.b16 %v1142, %v1140
    %v1191 = vpack.c.b16 %v1145, %v1143
    %v1192 = vpack.c.b16 %v1146, %v1144
    %v1193 = vpack.c.b16 %v1149, %v1147
    %v1194 = vpack.c.b16 %v1150, %v1148
    %v1195 = vpack.c.b16 %v1153, %v1151
    %v1196 = vpack.c.b16 %v1154, %v1152
    %v1197 = vpack.c.b16 %v1157, %v1155
    %v1198 = vpack.c.b16 %v1158, %v1156
    %v1199 = vpack.c.b16 %v1161, %v1159
    %v1200 = vpack.c.b16 %v1162, %v1160
    %v1201 = vpack.c.b16 %v1165, %v1163
    %v1202 = vpack.c.b16 %v1166, %v1164
    %v1203 = vpack.c.b16 %v1169, %v1167
    %v1204 = vpack.c.b16 %v1170, %v1168
    %v1205 = vpack.c.b16 %v1173, %v1171
    %v1206 = vpack.c.b16 %v1174, %v1172
    %1239 = vmatprep.subr.bf16.mxu0 %v1176
    %1240 = vmatpush1.bf16.msra.mxu0 %v1175
    %1241 = vmatprep.subr.bf16.mxu0 %v1178
    %1242 = vmatpush1.bf16.msra.mxu0 %v1177
    %1243 = vmatprep.subr.bf16.mxu0 %v1180
    %1244 = vmatpush1.bf16.msra.mxu0 %v1179
    %1245 = vmatprep.subr.bf16.mxu0 %v1182
    %1246 = vmatpush1.bf16.msra.mxu0 %v1181
    %1247 = vmatprep.subr.bf16.mxu0 %v1184
    %1248 = vmatpush1.bf16.msra.mxu0 %v1183
    %1249 = vmatprep.subr.bf16.mxu0 %v1186
    %1250 = vmatpush1.bf16.msra.mxu0 %v1185
    %1251 = vmatprep.subr.bf16.mxu0 %v1188
    %1252 = vmatpush1.bf16.msra.mxu0 %v1187
    %1253 = vmatprep.subr.bf16.mxu0 %v1190
    %1254 = vmatpush1.bf16.msra.mxu0 %v1189
    %1255 = vmatprep.subr.bf16.mxu0 %v1192
    %1256 = vmatpush1.bf16.msra.mxu0 %v1191
    %1257 = vmatprep.subr.bf16.mxu0 %v1194
    %1258 = vmatpush1.bf16.msra.mxu0 %v1193
    %1259 = vmatprep.subr.bf16.mxu0 %v1196
    %1260 = vmatpush1.bf16.msra.mxu0 %v1195
    %1261 = vmatprep.subr.bf16.mxu0 %v1198
    %1262 = vmatpush1.bf16.msra.mxu0 %v1197
    %1263 = vmatprep.subr.bf16.mxu0 %v1200
    %1264 = vmatpush1.bf16.msra.mxu0 %v1199
    %1265 = vmatprep.subr.bf16.mxu0 %v1202
    %1266 = vmatpush1.bf16.msra.mxu0 %v1201
    %1267 = vmatprep.subr.bf16.mxu0 %v1204
    %1268 = vmatpush1.bf16.msra.mxu0 %v1203
    %1269 = vmatprep.subr.bf16.mxu0 %v1206
    %1270 = vmatpush1.bf16.msra.mxu0 %v1205
    %1271 = vmatprep.mubr.bf16.mxu0 %v1033
    %1272 = vmatmul.mubr.bf16.gmra.mrb[0].mxu0 %v1032
    %v1273 = vpop.f32.mrb[0].mxu0
    %v1274 = vadd.f32 %v1072, %v1273
    %v1275 = vpop.f32.mrb[0].mxu0
    %v1276 = vadd.f32 %v1076, %v1275
    %v1277 = vpop.f32.mrb[0].mxu0
    %v1278 = vadd.f32 %v1072, %v1277
    %v1279 = vpop.f32.mrb[0].mxu0
    %v1280 = vadd.f32 %v1076, %v1279
    %1281 = vdwg.mxu0
    %v1282 = vmax.f32 %v1274, 0.0
    %v1283 = vmax.f32 %v1276, 0.0
    %v1284 = vmax.f32 %v1278, 0.0
    %v1285 = vmax.f32 %v1280, 0.0
    %v1286 = vpack.c.bf16 %v1284, %v1282
    %v1287 = vpack.c.bf16 %v1285, %v1283
    %v1288 = vld [vmem:[%s3] sm:$0xf]
    %v1289 = vld [vmem:[%s3 + $0x4] sm:$0xf]
    %v1290 = vld [vmem:[%s3 + $0x8] sm:$0xf]
    %v1291 = vld [vmem:[%s3 + $0xc] sm:$0xf]
    %v1292 = vld [vmem:[%s3 + $0x10] sm:$0xf]
    %v1293 = vld [vmem:[%s3 + $0x14] sm:$0xf]
    %v1294 = vld [vmem:[%s3 + $0x18] sm:$0xf]
    %v1295 = vld [vmem:[%s3 + $0x1c] sm:$0xf]
    %v1296 = vld [vmem:[%s3 + $0x20] sm:$0xf]
    %v1297 = vld [vmem:[%s3 + $0x24] sm:$0xf]
    %v1298 = vld [vmem:[%s3 + $0x28] sm:$0xf]
    %v1299 = vld [vmem:[%s3 + $0x2c] sm:$0xf]
    %v1300 = vld [vmem:[%s3 + $0x30] sm:$0xf]
    %v1301 = vld [vmem:[%s3 + $0x34] sm:$0xf]
    %v1302 = vld [vmem:[%s3 + $0x38] sm:$0xf]
    %v1303 = vld [vmem:[%s3 + $0x3c] sm:$0xf]
    %v1304 = vld [vmem:[%s3 + $0x40] sm:$0xf]
    %v1305 = vld [vmem:[%s3 + $0x44] sm:$0xf]
    %v1306 = vld [vmem:[%s3 + $0x48] sm:$0xf]
    %v1307 = vld [vmem:[%s3 + $0x4c] sm:$0xf]
    %v1308 = vld [vmem:[%s3 + $0x50] sm:$0xf]
    %v1309 = vld [vmem:[%s3 + $0x54] sm:$0xf]
    %v1310 = vld [vmem:[%s3 + $0x58] sm:$0xf]
    %v1311 = vld [vmem:[%s3 + $0x5c] sm:$0xf]
    %v1312 = vld [vmem:[%s3 + $0x60] sm:$0xf]
    %v1313 = vld [vmem:[%s3 + $0x64] sm:$0xf]
    %v1314 = vld [vmem:[%s3 + $0x68] sm:$0xf]
    %v1315 = vld [vmem:[%s3 + $0x6c] sm:$0xf]
    %v1316 = vld [vmem:[%s3 + $0x70] sm:$0xf]
    %v1317 = vld [vmem:[%s3 + $0x74] sm:$0xf]
    %v1318 = vld [vmem:[%s3 + $0x78] sm:$0xf]
    %v1319 = vld [vmem:[%s3 + $0x7c] sm:$0xf]
    %v1320 = vld [vmem:[%s5] sm:$0x1]
    %v1322 = vlaneseq
    %v1323 = vshrl.u32 %v1322, 7
    %v1324 = vsub.s32 0, %v1323
    %v1325 = vrot.slane %v1320, %v1324
    %v1359 = vunpack.c.l.b16 %v1288
    %v1360 = vunpack.c.l.b16 %v1289
    %v1361 = vunpack.c.l.b16 %v1290
    %v1362 = vunpack.c.l.b16 %v1291
    %v1363 = vunpack.c.l.b16 %v1292
    %v1364 = vunpack.c.l.b16 %v1293
    %v1365 = vunpack.c.l.b16 %v1294
    %v1366 = vunpack.c.l.b16 %v1295
    %v1367 = vunpack.c.l.b16 %v1296
    %v1368 = vunpack.c.l.b16 %v1297
    %v1369 = vunpack.c.l.b16 %v1298
    %v1370 = vunpack.c.l.b16 %v1299
    %v1371 = vunpack.c.l.b16 %v1300
    %v1372 = vunpack.c.l.b16 %v1301
    %v1373 = vunpack.c.l.b16 %v1302
    %v1374 = vunpack.c.l.b16 %v1303
    %v1375 = vunpack.c.l.b16 %v1304
    %v1376 = vunpack.c.l.b16 %v1305
    %v1377 = vunpack.c.l.b16 %v1306
    %v1378 = vunpack.c.l.b16 %v1307
    %v1379 = vunpack.c.l.b16 %v1308
    %v1380 = vunpack.c.l.b16 %v1309
    %v1381 = vunpack.c.l.b16 %v1310
    %v1382 = vunpack.c.l.b16 %v1311
    %v1383 = vunpack.c.l.b16 %v1312
    %v1384 = vunpack.c.l.b16 %v1313
    %v1385 = vunpack.c.l.b16 %v1314
    %v1386 = vunpack.c.l.b16 %v1315
    %v1387 = vunpack.c.l.b16 %v1316
    %v1388 = vunpack.c.l.b16 %v1317
    %v1389 = vunpack.c.l.b16 %v1318
    %v1390 = vunpack.c.l.b16 %v1319
    %v1391 = vpack.c.b16 %v1360, %v1359
    %v1392 = vpack.c.b16 %v1362, %v1361
    %v1393 = vpack.c.b16 %v1364, %v1363
    %v1394 = vpack.c.b16 %v1366, %v1365
    %v1395 = vpack.c.b16 %v1368, %v1367
    %v1396 = vpack.c.b16 %v1370, %v1369
    %v1397 = vpack.c.b16 %v1372, %v1371
    %v1398 = vpack.c.b16 %v1374, %v1373
    %v1399 = vpack.c.b16 %v1376, %v1375
    %v1400 = vpack.c.b16 %v1378, %v1377
    %v1401 = vpack.c.b16 %v1380, %v1379
    %v1402 = vpack.c.b16 %v1382, %v1381
    %v1403 = vpack.c.b16 %v1384, %v1383
    %v1404 = vpack.c.b16 %v1386, %v1385
    %v1405 = vpack.c.b16 %v1388, %v1387
    %v1406 = vpack.c.b16 %v1390, %v1389
    %1423 = vmatprep.subr.bf16.mxu0 0
    %1424 = vmatpush1.bf16.msra.mxu0 %v1391
    %1425 = vmatprep.subr.bf16.mxu0 0
    %1426 = vmatpush1.bf16.msra.mxu0 %v1392
    %1427 = vmatprep.subr.bf16.mxu0 0
    %1428 = vmatpush1.bf16.msra.mxu0 %v1393
    %1429 = vmatprep.subr.bf16.mxu0 0
    %1430 = vmatpush1.bf16.msra.mxu0 %v1394
    %1431 = vmatprep.subr.bf16.mxu0 0
    %1432 = vmatpush1.bf16.msra.mxu0 %v1395
    %1433 = vmatprep.subr.bf16.mxu0 0
    %1434 = vmatpush1.bf16.msra.mxu0 %v1396
    %1435 = vmatprep.subr.bf16.mxu0 0
    %1436 = vmatpush1.bf16.msra.mxu0 %v1397
    %1437 = vmatprep.subr.bf16.mxu0 0
    %1438 = vmatpush1.bf16.msra.mxu0 %v1398
    %1439 = vmatprep.subr.bf16.mxu0 0
    %1440 = vmatpush1.bf16.msra.mxu0 %v1399
    %1441 = vmatprep.subr.bf16.mxu0 0
    %1442 = vmatpush1.bf16.msra.mxu0 %v1400
    %1443 = vmatprep.subr.bf16.mxu0 0
    %1444 = vmatpush1.bf16.msra.mxu0 %v1401
    %1445 = vmatprep.subr.bf16.mxu0 0
    %1446 = vmatpush1.bf16.msra.mxu0 %v1402
    %1447 = vmatprep.subr.bf16.mxu0 0
    %1448 = vmatpush1.bf16.msra.mxu0 %v1403
    %1449 = vmatprep.subr.bf16.mxu0 0
    %1450 = vmatpush1.bf16.msra.mxu0 %v1404
    %1451 = vmatprep.subr.bf16.mxu0 0
    %1452 = vmatpush1.bf16.msra.mxu0 %v1405
    %1453 = vmatprep.subr.bf16.mxu0 0
    %1454 = vmatpush1.bf16.msra.mxu0 %v1406
    %1455 = vmatprep.mubr.bf16.mxu0 %v1287
    %1456 = vmatmul.mubr.bf16.gmra.mrb[0].mxu0 %v1286
    %v1457 = vpop.f32.mrb[0].mxu0
    %v1458 = vadd.f32 %v1325, %v1457
    %v1459 = vpop.f32.mrb[0].mxu0
    %v1460 = vpop.f32.mrb[0].mxu0
    %v1461 = vadd.f32 %v1325, %v1460
    %v1462 = vpop.f32.mrb[0].mxu0
    %1463 = vdwg.mxu0
    %v1464 = vpack.c.bf16 %v1461, %v1458
    %v1466 = vunpack.c.l.b16 %v1464
    %v1467 = vunpack.c.h.b16 %v1464
    %v1468 = vpack.c.b16 %v1466, %v1466
    %v1469 = vpack.c.b16 %v1467, %v1467
    %1472 = vst [vmem:[%s6] sm:$0xf] %v1468
    %1473 = vst [vmem:[%s6 + $0x4] sm:$0xf] %v1469
    // Predicated region
    $region34: #{_forward_padded.1} parent=1 // pred_check
      _
    $region35: #{_forward_padded.1} parent=1 // pred_check_branch
      %1475 = sbr.rel (0) target = $region37
    $region36: #{_forward_padded.1} parent=1 // pred_region
      _
    $region37: #{_forward_padded.1} parent=1 // pred_fallthru
      _
    // Predicated region
    $region38: #{_forward_padded.1} parent=1 // pred_check
      _
    $region39: #{_forward_padded.1} parent=1 // pred_check_branch
      %1477 = sbr.rel (0) target = $region41
    $region40: #{_forward_padded.1} parent=1 // pred_region
      _
    $region41: #{_forward_padded.1} parent=1 // pred_fallthru
      _
    %1478 = vsyncpa [#allocation3], 1
    %1479 = vsyncpa [#allocation5], 1

</llo_original>
